<compile_context>
chip_gen: v6e
topology: v6e:2x2x1
jax: 0.10.0
libtpu: 0.0.40
codegen_flags: <defaults>
</compile_context>

<pallas_src>
import functools

import numpy as np

import jax
import jax.numpy as jnp
from jax.experimental import pallas as pl
from jax.experimental.pallas import tpu as pltpu


def _build_pdc_weights():
    """Deterministic weights/biases exactly as PdcNet.__init__ builds them."""
    bases = [
        np.array([[-1., 0., 1.], [-1., 0., 1.], [-1., 0., 1.]], np.float32),
        np.array([[1., 1., 1.], [0., 0., 0.], [-1., -1., -1.]], np.float32),
        np.array([[-1., 0., 1.], [-2., 0., 2.], [-1., 0., 1.]], np.float32),
        np.array([[1., 2., 1.], [0., 0., 0.], [-1., -2., -1.]], np.float32),
    ]
    # createweight: [1,1,3,3] -> tile to [3,3,3,3] (same base for every pair).
    weights = [np.tile(b.reshape(1, 1, 3, 3), (3, 3, 1, 1)) for b in bases]
    biases = [np.zeros((3,), np.float32) for _ in bases]
    return weights, biases


def _rank1_factor(base):
    """Return (v, h) with base[kh, kw] == v[kh] * h[kw] exactly, else None."""
    base = np.asarray(base, np.float64)
    nz_rows = np.flatnonzero(np.any(base != 0.0, axis=1))
    if nz_rows.size == 0:
        return np.zeros(base.shape[0]), np.zeros(base.shape[1])
    r0 = int(nz_rows[0])
    h = base[r0].copy()
    j0 = int(np.flatnonzero(h)[0])
    v = base[:, j0] / h[j0]
    if np.array_equal(np.outer(v, h), base):
        return v, h
    return None


def _lincomb(terms):
    """Sum coef*val with trace-time constant coefs: skip zeros, +-1 -> add/sub."""
    terms = [(float(c), v) for c, v in terms if v is not None and float(c) != 0.0]
    if not terms:
        return None
    terms.sort(key=lambda t: 0 if t[0] == 1.0 else 1)   # seed with a +1 term if any
    c0, v0 = terms[0]
    acc = v0 if c0 == 1.0 else c0 * v0
    for c, v in terms[1:]:
        if c == 1.0:
            acc = acc + v
        elif c == -1.0:
            acc = acc - v
        else:
            acc = acc + c * v
    return acc


def _conv3x3_flat(f, base, masks, H, W):
    """3x3 conv (stride 1, zero padding 1) of flat images.

    f     : (rows, H*W) value; each sublane row is one flattened (row-major) image.
    base  : numpy (3, 3) compile-time constant kernel.
    masks : (m_left, m_right, m_top, m_bot), each (1, H*W), zeroing circular-roll
            reads that cross the corresponding image edge (= zero padding).
    Returns (rows, H*W) value, or None if base is all-zero.
    """
    HW = H * W
    m_l, m_r, m_t, m_b = masks

    def shift(val, d):
        # shifted[p] = val[p + d] within the flat image (circular; caller masks edges).
        return val if d == 0 else pltpu.roll(val, (-d) % HW, 1)

    fact = _rank1_factor(base)
    if fact is not None:
        v, h = fact
        # Horizontal 1x3 pass; edge masks applied once to the +-1 shifted values
        # and implicitly reused by the vertical pass (row shifts keep columns).
        left = m_l * shift(f, -1) if h[0] != 0.0 else None
        right = m_r * shift(f, +1) if h[2] != 0.0 else None
        hp = _lincomb([(h[0], left), (h[1], f), (h[2], right)])
        if hp is None:
            return None
        # Vertical 3x1 pass.
        up = m_t * shift(hp, -W) if v[0] != 0.0 else None
        down = m_b * shift(hp, +W) if v[2] != 0.0 else None
        return _lincomb([(v[0], up), (v[1], hp), (v[2], down)])

    # Generic 9-tap fallback (never taken for PdcNet's rank-1 bases).
    terms = []
    for kh in range(3):
        for kw in range(3):
            c = float(base[kh, kw])
            if c == 0.0:
                continue
            dh, dw = kh - 1, kw - 1
            s = shift(f, dh * W + dw)
            if dw < 0:
                s = m_l * s
            elif dw > 0:
                s = m_r * s
            if dh < 0:
                s = m_t * s
            elif dh > 0:
                s = m_b * s
            terms.append((c, s))
    return _lincomb(terms)


def _make_kernel(C, H, W, base1, base2, c_out, out_scale):
    """Fused conv3x3 -> conv3x3 kernel on lane-dense flat slabs (baked constants)."""
    HW = H * W

    def kernel(x_ref, mask_ref, o_ref):
        # x_ref   : VMEM (NB, C * H*W)     lane-dense, one flat image per sublane row
        # mask_ref: VMEM (4, H*W)          left / right / top / bottom edge masks
        # o_ref   : VMEM (NB, Cout * H*W)  lane-dense output slab (128-aligned stores)
        masks = (mask_ref[0:1, :], mask_ref[1:2, :],
                 mask_ref[2:3, :], mask_ref[3:4, :])

        # Identical per-input-channel weights -> conv the channel sum once.
        u = x_ref[:, 0:HW]
        for c in range(1, C):
            u = u + x_ref[:, c * HW:(c + 1) * HW]

        g = _conv3x3_flat(u, base1, masks, H, W)     # conv1 (all mid channels equal)
        if g is None:
            g = jnp.zeros_like(u)
        y = _conv3x3_flat(g, base2, masks, H, W)     # conv2 on one representative channel
        if y is None:
            y = jnp.zeros_like(u)
        if out_scale != 1.0:
            y = y * out_scale                        # folds conv2's sum over mid channels

        for o in range(c_out):                       # identical output channels
            o_ref[:, o * HW:(o + 1) * HW] = y

    return kernel


def _pdcnet_pallas(x, w1, b1, w2, b2):
    N, C, H, W = x.shape
    HW = H * W
    w1 = np.asarray(w1, np.float32)
    b1 = np.asarray(b1, np.float32)
    w2 = np.asarray(w2, np.float32)
    b2 = np.asarray(b2, np.float32)
    c_mid, c_out = int(w1.shape[0]), int(w2.shape[0])

    # PdcNet's createweight tiles one 3x3 base over every (out, in) pair; bias is 0.
    assert w1.shape[1] == C and w2.shape[1] == c_mid
    assert all(np.array_equal(w1[o, i], w1[0, 0]) for o in range(c_mid) for i in range(C))
    assert all(np.array_equal(w2[o, i], w2[0, 0]) for o in range(c_out) for i in range(c_mid))
    assert not np.any(b1) and not np.any(b2)
    base1, base2 = w1[0, 0], w2[0, 0]

    # Edge masks (trace-time numpy constants; tiny (4, HW) f32 VMEM input).
    col = np.arange(HW) % W
    row = np.arange(HW) // W
    masks = np.ones((4, HW), np.float32)
    masks[0, col == 0] = 0.0        # left-neighbour reads  (dw == -1)
    masks[1, col == W - 1] = 0.0    # right-neighbour reads (dw == +1)
    masks[2, row == 0] = 0.0        # up-neighbour reads    (dh == -1)
    masks[3, row == H - 1] = 0.0    # down-neighbour reads  (dh == +1)

    # Fill the 8 f32 sublanes: batch blocks of up to 8 images, "parallel" grid axis
    # (v7x: both TensorCores; also bounds per-block VMEM when N / H*W scale).
    NB = N if N < 8 else 8
    grid = (pl.cdiv(N, NB),)

    kernel = _make_kernel(C, H, W, base1, base2, c_out, float(c_mid))

    x_flat = x.astype(jnp.float32).reshape(N, C * HW)   # contiguous -> free reshape

    out_flat = pl.pallas_call(
        kernel,
        out_shape=jax.ShapeDtypeStruct((N, c_out * HW), jnp.float32),
        grid=grid,
        in_specs=[
            pl.BlockSpec((NB, C * HW), lambda i: (i, 0)),   # lane-dense activations
            pl.BlockSpec((4, HW), lambda i: (0, 0)),        # edge masks (replicated)
        ],
        out_specs=pl.BlockSpec((NB, c_out * HW), lambda i: (i, 0)),
        compiler_params=pltpu.CompilerParams(
            dimension_semantics=("parallel",),
        ),
    )(x_flat, jnp.asarray(masks))
    return out_flat.reshape(N, c_out, H, W)


@functools.partial(jax.jit, static_argnums=(0,))
def _pdcnet_forward_jit(idx, x):
    weights, biases = _build_pdc_weights()
    w1, b1 = weights[idx % 2], biases[idx % 2]              # layer  = layers[idx % 2]
    w2, b2 = weights[(idx + 1) % 2], biases[(idx + 1) % 2]  # layer2 = layers[(idx+1) % 2]
    return _pdcnet_pallas(x, w1, b1, w2, b2)


def pdcnet_forward(idx, x):
    """Mirror of PdcNet.forward(idx, x); idx is a static Python int (as in torch)."""
    return _pdcnet_forward_jit(int(idx) % 12, x)


def _conv_ref(x, w, b):
    y = jax.lax.conv_general_dilated(
        x, jnp.asarray(w), window_strides=(1, 1), padding=((1, 1), (1, 1)),
        dimension_numbers=('NCHW', 'OIHW', 'NCHW'))
    return y + jnp.asarray(b)[None, :, None, None]


if __name__ == "__main__":
    key = jax.random.PRNGKey(0)
    # Batch 8 fills all f32 sublanes; Conv2d requires in_channels == 3.
    N, C, H, W = 8, 3, 16, 16
    x = jax.random.normal(key, (N, C, H, W), dtype=jnp.float32)

    weights, biases = _build_pdc_weights()

    for idx in (5, 0):                    # exercise both layer orderings
        out = jax.block_until_ready(pdcnet_forward(idx, x))
        i = idx % 12
        ref = _conv_ref(_conv_ref(x, weights[i % 2], biases[i % 2]),
                        weights[(i + 1) % 2], biases[(i + 1) % 2])
        assert out.shape == (N, C, H, W) and out.dtype == jnp.float32
        assert jnp.allclose(out, ref, atol=1e-3, rtol=1e-4), f"mismatch vs reference (idx={idx})"

    print("KERNEL_OK")
</pallas_src>

<mosaic_0001>
module attributes {stable_mosaic.version = 11 : i64} {
  func.func @kernel(%arg0: i32, %arg1: memref<8x768xf32, #tpu.memory_space<vmem>>, %arg2: memref<4x256xf32, #tpu.memory_space<vmem>>, %arg3: memref<8x768xf32, #tpu.memory_space<vmem>>) attributes {dimension_semantics = [#tpu.dimension_semantics<parallel>], iteration_bounds = array<i64: 1>, scalar_prefetch = 0 : i64, scratch_operands = 0 : i64, tpu.core_type = #tpu.core_type<tc>, window_params = [{transform_indices = @transform_0, window_bounds = array<i64: 8, 768>}, {pipeline_mode = #tpu.pipeline_mode<synchronous>, transform_indices = @transform_1, window_bounds = array<i64: 4, 256>}, {transform_indices = @transform_2, window_bounds = array<i64: 8, 768>}]} {
    %c0 = arith.constant 0 : index
    %c0_0 = arith.constant 0 : index
    %0 = vector.load %arg2[%c0, %c0_0] : memref<4x256xf32, #tpu.memory_space<vmem>>, vector<1x256xf32>
    %c1 = arith.constant 1 : index
    %c0_1 = arith.constant 0 : index
    %1 = vector.load %arg2[%c1, %c0_1] : memref<4x256xf32, #tpu.memory_space<vmem>>, vector<1x256xf32>
    %c2 = arith.constant 2 : index
    %c0_2 = arith.constant 0 : index
    %2 = vector.load %arg2[%c2, %c0_2] : memref<4x256xf32, #tpu.memory_space<vmem>>, vector<1x256xf32>
    %c3 = arith.constant 3 : index
    %c0_3 = arith.constant 0 : index
    %3 = vector.load %arg2[%c3, %c0_3] : memref<4x256xf32, #tpu.memory_space<vmem>>, vector<1x256xf32>
    %c0_4 = arith.constant 0 : index
    %c0_5 = arith.constant 0 : index
    %4 = vector.load %arg1[%c0_4, %c0_5] : memref<8x768xf32, #tpu.memory_space<vmem>>, vector<8x256xf32>
    %c0_6 = arith.constant 0 : index
    %c256 = arith.constant 256 : index
    %5 = vector.load %arg1[%c0_6, %c256] : memref<8x768xf32, #tpu.memory_space<vmem>>, vector<8x256xf32>
    %6 = arith.addf %4, %5 : vector<8x256xf32>
    %c0_7 = arith.constant 0 : index
    %c512 = arith.constant 512 : index
    %7 = vector.load %arg1[%c0_7, %c512] : memref<8x768xf32, #tpu.memory_space<vmem>>, vector<8x256xf32>
    %8 = arith.addf %6, %7 : vector<8x256xf32>
    %c1_i32 = arith.constant 1 : i32
    %9 = tpu.dynamic_rotate %8 by %c1_i32 dim 1 : vector<8x256xf32>, i32 -> vector<8x256xf32>
    %10 = vector.broadcast %0 : vector<1x256xf32> to vector<8x256xf32>
    %11 = arith.mulf %10, %9 : vector<8x256xf32>
    %c255_i32 = arith.constant 255 : i32
    %12 = tpu.dynamic_rotate %8 by %c255_i32 dim 1 : vector<8x256xf32>, i32 -> vector<8x256xf32>
    %13 = vector.broadcast %1 : vector<1x256xf32> to vector<8x256xf32>
    %14 = arith.mulf %13, %12 : vector<8x256xf32>
    %15 = arith.addf %11, %8 : vector<8x256xf32>
    %16 = arith.addf %15, %14 : vector<8x256xf32>
    %c16_i32 = arith.constant 16 : i32
    %17 = tpu.dynamic_rotate %16 by %c16_i32 dim 1 : vector<8x256xf32>, i32 -> vector<8x256xf32>
    %18 = vector.broadcast %2 : vector<1x256xf32> to vector<8x256xf32>
    %19 = arith.mulf %18, %17 : vector<8x256xf32>
    %c240_i32 = arith.constant 240 : i32
    %20 = tpu.dynamic_rotate %16 by %c240_i32 dim 1 : vector<8x256xf32>, i32 -> vector<8x256xf32>
    %21 = vector.broadcast %3 : vector<1x256xf32> to vector<8x256xf32>
    %22 = arith.mulf %21, %20 : vector<8x256xf32>
    %23 = arith.subf %19, %22 : vector<8x256xf32>
    %c1_i32_8 = arith.constant 1 : i32
    %24 = tpu.dynamic_rotate %23 by %c1_i32_8 dim 1 : vector<8x256xf32>, i32 -> vector<8x256xf32>
    %25 = vector.broadcast %0 : vector<1x256xf32> to vector<8x256xf32>
    %26 = arith.mulf %25, %24 : vector<8x256xf32>
    %c255_i32_9 = arith.constant 255 : i32
    %27 = tpu.dynamic_rotate %23 by %c255_i32_9 dim 1 : vector<8x256xf32>, i32 -> vector<8x256xf32>
    %28 = vector.broadcast %1 : vector<1x256xf32> to vector<8x256xf32>
    %29 = arith.mulf %28, %27 : vector<8x256xf32>
    %30 = arith.subf %29, %26 : vector<8x256xf32>
    %c16_i32_10 = arith.constant 16 : i32
    %31 = tpu.dynamic_rotate %30 by %c16_i32_10 dim 1 : vector<8x256xf32>, i32 -> vector<8x256xf32>
    %32 = vector.broadcast %2 : vector<1x256xf32> to vector<8x256xf32>
    %33 = arith.mulf %32, %31 : vector<8x256xf32>
    %c240_i32_11 = arith.constant 240 : i32
    %34 = tpu.dynamic_rotate %30 by %c240_i32_11 dim 1 : vector<8x256xf32>, i32 -> vector<8x256xf32>
    %35 = vector.broadcast %3 : vector<1x256xf32> to vector<8x256xf32>
    %36 = arith.mulf %35, %34 : vector<8x256xf32>
    %37 = arith.addf %33, %30 : vector<8x256xf32>
    %38 = arith.addf %37, %36 : vector<8x256xf32>
    %cst = arith.constant 3.000000e+00 : f32
    %39 = vector.broadcast %cst : f32 to vector<8x256xf32>
    %40 = arith.mulf %38, %39 : vector<8x256xf32>
    %c0_12 = arith.constant 0 : index
    %c0_13 = arith.constant 0 : index
    %41 = vector.load %arg3[%c0_12, %c0_13] : memref<8x768xf32, #tpu.memory_space<vmem>>, vector<8x256xf32>
    tpu.vector_store %arg3[%c0_12, %c0_13], %40 {strides = array<i32>} : memref<8x768xf32, #tpu.memory_space<vmem>>, vector<8x256xf32>,
    %c0_14 = arith.constant 0 : index
    %c256_15 = arith.constant 256 : index
    %42 = vector.load %arg3[%c0_14, %c256_15] : memref<8x768xf32, #tpu.memory_space<vmem>>, vector<8x256xf32>
    tpu.vector_store %arg3[%c0_14, %c256_15], %40 {strides = array<i32>} : memref<8x768xf32, #tpu.memory_space<vmem>>, vector<8x256xf32>,
    %c0_16 = arith.constant 0 : index
    %c512_17 = arith.constant 512 : index
    %43 = vector.load %arg3[%c0_16, %c512_17] : memref<8x768xf32, #tpu.memory_space<vmem>>, vector<8x256xf32>
    tpu.vector_store %arg3[%c0_16, %c512_17], %40 {strides = array<i32>} : memref<8x768xf32, #tpu.memory_space<vmem>>, vector<8x256xf32>,
    return
  }
  func.func @transform_0(%arg0: i32) -> (i32, i32) {
    %c0_i32 = arith.constant 0 : i32
    %c0_i32_0 = arith.constant 0 : i32
    return %arg0, %c0_i32 : i32, i32
  }
  func.func @transform_1(%arg0: i32) -> (i32, i32) {
    %c0_i32 = arith.constant 0 : i32
    %c0_i32_0 = arith.constant 0 : i32
    %c0_i32_1 = arith.constant 0 : i32
    return %c0_i32, %c0_i32_0 : i32, i32
  }
  func.func @transform_2(%arg0: i32) -> (i32, i32) {
    %c0_i32 = arith.constant 0 : i32
    %c0_i32_0 = arith.constant 0 : i32
    return %arg0, %c0_i32 : i32, i32
  }
}

</mosaic_0001>

<llo_original>
// kernel: _pdcnet_forward_jit.1
$region0: #{_pdcnet_forward_jit.1}
  #allocation0 [shape = 'u32[]', space=smem, size = 0x4, offset = 0x4, fixed_abs, tag = 'smem constant byte address 0x4 - core index']
  #allocation1 [shape = 'u32[144,128]{1,0:T(1,128)}', space=vmem, size = 0x12000, scoped, tag = 'internal scratch']
  %s0 = inlined_call_operand.vmem [shape: f32[8,768], index: 0, kind: input, shape index: {}]
  %s1 = inlined_call_operand.vmem [shape: f32[4,256], index: 1, kind: input, shape index: {}]
  %s2 = inlined_call_operand.vmem [shape: f32[8,768], index: 2, kind: output, shape index: {}]
  %s3 = sld [smem:[#allocation0]]
  $region18: #{_pdcnet_forward_jit.1} parent=0
    _
  %s5 = ssub.s32 1, %s3
  %s6 = scalar_select 0, %s5, %s3
  // Predicated region
  $region2: #{_pdcnet_forward_jit.1} parent=0 // pred_check
    _
  $region3: #{_pdcnet_forward_jit.1} parent=0 // pred_check_branch
    %8 = sbr.rel (0) target = $region5
  $region4: #{_pdcnet_forward_jit.1} parent=0 // pred_region
    _
  $region5: #{_pdcnet_forward_jit.1} parent=0 // pred_fallthru
    _
  // Predicated region
  $region6: #{_pdcnet_forward_jit.1} parent=0 // pred_check
    _
  $region7: #{_pdcnet_forward_jit.1} parent=0 // pred_check_branch
    %10 = sbr.rel (0) target = $region9
  $region8: #{_pdcnet_forward_jit.1} parent=0 // pred_region
    _
  $region9: #{_pdcnet_forward_jit.1} parent=0 // pred_fallthru
    _
  %v11 = vld [vmem:[%s1] ss:$4 sm:$0x3]
  %s12 = scalar_lea.vmem %s1, 1
  %v13 = vld [vmem:[%s12] ss:$4 sm:$0x3]
  %s14 = scalar_lea.vmem %s1, 2
  %v15 = vld [vmem:[%s14] ss:$4 sm:$0x3]
  %s16 = scalar_lea.vmem %s1, 3
  %v17 = vld [vmem:[%s16] ss:$4 sm:$0x3]
  %v18 = vld [vmem:[%s0] sm:$0xff]
  %v19 = vld [vmem:[%s0 + $0x8] sm:$0xff]
  %v20 = vld [vmem:[%s0 + $0x10] sm:$0xff]
  %v21 = vld [vmem:[%s0 + $0x18] sm:$0xff]
  %v22 = vadd.f32 %v18, %v20
  %v23 = vadd.f32 %v19, %v21
  %v24 = vld [vmem:[%s0 + $0x20] sm:$0xff]
  %v25 = vld [vmem:[%s0 + $0x28] sm:$0xff]
  %v26 = vadd.f32 %v22, %v24
  %v27 = vadd.f32 %v23, %v25
  %28 = vrot.lane.b32.xlu0 %v26, 1
  %v29 = vpop.permute.xlu0 %28
  %30 = vrot.lane.b32.xlu0 %v27, 1
  %v31 = vpop.permute.xlu0 %30
  %v32 = vlaneseq
  %v33 = vand.u32 %v32, 127
  %vm34 = vcmp.lt.s32.totalorder %v33, 1
  %v35 = vsel %vm34, %v29, %v31
  %v36 = vsel %vm34, %v31, %v29
  %v38 = vlaneseq
  %v39 = vshrl.u32 %v38, 7
  %v40 = vsub.s32 0, %v39
  %v41 = vrot.slane %v11, %v40
  %v42 = vlaneseq
  %v43 = vshrl.u32 %v42, 7
  %v44 = vsub.s32 1, %v43
  %v45 = vrot.slane %v11, %v44
  %v48 = vmul.f32 %v41, %v36
  %v49 = vmul.f32 %v45, %v35
  %50 = vrot.lane.b32.xlu0 %v26, 127
  %v51 = vpop.permute.xlu0 %50
  %52 = vrot.lane.b32.xlu0 %v27, 127
  %v53 = vpop.permute.xlu0 %52
  %vm54 = vcmp.lt.s32.totalorder %v33, 127
  %v55 = vsel %vm54, %v51, %v53
  %v56 = vsel %vm54, %v53, %v51
  %v58 = vlaneseq
  %v59 = vshrl.u32 %v58, 7
  %v60 = vsub.s32 0, %v59
  %v61 = vrot.slane %v13, %v60
  %v62 = vlaneseq
  %v63 = vshrl.u32 %v62, 7
  %v64 = vsub.s32 1, %v63
  %v65 = vrot.slane %v13, %v64
  %v68 = vmul.f32 %v61, %v55
  %v69 = vmul.f32 %v65, %v56
  %v70 = vadd.f32 %v48, %v26
  %v71 = vadd.f32 %v49, %v27
  %v72 = vadd.f32 %v70, %v68
  %v73 = vadd.f32 %v71, %v69
  %74 = vrot.lane.b32.xlu0 %v72, 16
  %v75 = vpop.permute.xlu0 %74
  %76 = vrot.lane.b32.xlu0 %v73, 16
  %v77 = vpop.permute.xlu0 %76
  %vm78 = vcmp.lt.s32.totalorder %v33, 16
  %v79 = vsel %vm78, %v75, %v77
  %v80 = vsel %vm78, %v77, %v75
  %v82 = vlaneseq
  %v83 = vshrl.u32 %v82, 7
  %v84 = vsub.s32 0, %v83
  %v85 = vrot.slane %v15, %v84
  %v86 = vlaneseq
  %v87 = vshrl.u32 %v86, 7
  %v88 = vsub.s32 1, %v87
  %v89 = vrot.slane %v15, %v88
  %v92 = vmul.f32 %v85, %v80
  %v93 = vmul.f32 %v89, %v79
  %94 = vrot.lane.b32.xlu0 %v72, 112
  %v95 = vpop.permute.xlu0 %94
  %96 = vrot.lane.b32.xlu0 %v73, 112
  %v97 = vpop.permute.xlu0 %96
  %vm98 = vcmp.lt.s32.totalorder %v33, 112
  %v99 = vsel %vm98, %v95, %v97
  %v100 = vsel %vm98, %v97, %v95
  %v102 = vlaneseq
  %v103 = vshrl.u32 %v102, 7
  %v104 = vsub.s32 0, %v103
  %v105 = vrot.slane %v17, %v104
  %v106 = vlaneseq
  %v107 = vshrl.u32 %v106, 7
  %v108 = vsub.s32 1, %v107
  %v109 = vrot.slane %v17, %v108
  %v112 = vmul.f32 %v105, %v99
  %v113 = vmul.f32 %v109, %v100
  %v114 = vsub.f32 %v92, %v112
  %v115 = vsub.f32 %v93, %v113
  %116 = vrot.lane.b32.xlu0 %v114, 1
  %v117 = vpop.permute.xlu0 %116
  %118 = vrot.lane.b32.xlu0 %v115, 1
  %v119 = vpop.permute.xlu0 %118
  %v120 = vsel %vm34, %v117, %v119
  %v121 = vsel %vm34, %v119, %v117
  %v122 = vmul.f32 %v41, %v121
  %v123 = vmul.f32 %v45, %v120
  %124 = vrot.lane.b32.xlu0 %v114, 127
  %v125 = vpop.permute.xlu0 %124
  %126 = vrot.lane.b32.xlu0 %v115, 127
  %v127 = vpop.permute.xlu0 %126
  %v128 = vsel %vm54, %v125, %v127
  %v129 = vsel %vm54, %v127, %v125
  %v130 = vmul.f32 %v61, %v128
  %v131 = vmul.f32 %v65, %v129
  %v132 = vsub.f32 %v130, %v122
  %v133 = vsub.f32 %v131, %v123
  %134 = vrot.lane.b32.xlu0 %v132, 16
  %v135 = vpop.permute.xlu0 %134
  %136 = vrot.lane.b32.xlu0 %v133, 16
  %v137 = vpop.permute.xlu0 %136
  %v138 = vsel %vm78, %v135, %v137
  %v139 = vsel %vm78, %v137, %v135
  %v140 = vmul.f32 %v85, %v139
  %v141 = vmul.f32 %v89, %v138
  %142 = vrot.lane.b32.xlu0 %v132, 112
  %v143 = vpop.permute.xlu0 %142
  %144 = vrot.lane.b32.xlu0 %v133, 112
  %v145 = vpop.permute.xlu0 %144
  %v146 = vsel %vm98, %v143, %v145
  %v147 = vsel %vm98, %v145, %v143
  %v148 = vmul.f32 %v105, %v146
  %v149 = vmul.f32 %v109, %v147
  %v150 = vadd.f32 %v140, %v132
  %v151 = vadd.f32 %v141, %v133
  %v152 = vadd.f32 %v150, %v148
  %v153 = vadd.f32 %v151, %v149
  %v154 = vmul.f32 %v152, 3.0
  %v155 = vmul.f32 %v153, 3.0
  %156 = vst [vmem:[%s2] sm:$0xff] %v154
  %157 = vst [vmem:[%s2 + $0x8] sm:$0xff] %v155
  %158 = vst [vmem:[%s2 + $0x10] sm:$0xff] %v154
  %159 = vst [vmem:[%s2 + $0x18] sm:$0xff] %v155
  %160 = vst [vmem:[%s2 + $0x20] sm:$0xff] %v154
  %161 = vst [vmem:[%s2 + $0x28] sm:$0xff] %v155
  // Predicated region
  $region10: #{_pdcnet_forward_jit.1} parent=0 // pred_check
    _
  $region11: #{_pdcnet_forward_jit.1} parent=0 // pred_check_branch
    %163 = sbr.rel (0) target = $region13
  $region12: #{_pdcnet_forward_jit.1} parent=0 // pred_region
    _
  $region13: #{_pdcnet_forward_jit.1} parent=0 // pred_fallthru
    _
  // Predicated region
  $region14: #{_pdcnet_forward_jit.1} parent=0 // pred_check
    _
  $region15: #{_pdcnet_forward_jit.1} parent=0 // pred_check_branch
    %165 = sbr.rel (0) target = $region17
  $region16: #{_pdcnet_forward_jit.1} parent=0 // pred_region
    _
  $region17: #{_pdcnet_forward_jit.1} parent=0 // pred_fallthru
    _

</llo_original>
